<compile_context>
chip_gen: v7x
topology: tpu7x:2x2x1
jax: 0.10.0
libtpu: 0.0.40
codegen_flags: <defaults>
</compile_context>

<pallas_src>
import functools

import jax
import jax.numpy as jnp
from jax.experimental import pallas as pl
from jax.experimental.pallas import tpu as pltpu


def _round_up(x, m):
    return ((x + m - 1) // m) * m


def _pad2(a, shape):
    return jnp.pad(a, [(0, s - d) for d, s in zip(a.shape, shape)])


# ----------------------------------------------------------------------------
# Pallas kernel: shared MLP + attention pooling over neighbors
# ----------------------------------------------------------------------------
def make_sa_kernel(num_layers, tg, k_real, k_pad, cout):
    """Kernel refs: (x, w1, b1, ..., wL, bL, wa, out).

    x   : (tg*k_pad, Cin_pad) bf16 -- row g*k_pad + k = neighbor k of centroid g
          (rows with k >= k_real are zero padding, masked out of the softmax).
    w_l : (C_{l-1}_pad, C_l_pad) bf16 (eval BatchNorm folded), b_l : (1, C_l_pad) f32.
    wa  : (1, cout) f32 attention-score weights (pad columns zero).
    out : (tg, cout) f32 attention-pooled features (pad columns exactly zero).
    """

    def kernel(x_ref, *refs):
        out_ref = refs[-1]

        # Shared MLP: 1x1 conv == per-row matmul -> MXU (bf16 in, f32 acc).
        h = x_ref[...]                                       # bf16 (tg*k_pad, Cin_pad)
        for l in range(num_layers):
            w = refs[2 * l][...]                             # bf16
            b = refs[2 * l + 1][...]                         # f32 (1, C)
            acc = jnp.dot(h, w, preferred_element_type=jnp.float32)
            hf = jnp.maximum(acc + b, 0.0)                   # f32, VPU
            h = hf.astype(jnp.bfloat16) if l + 1 < num_layers else hf

        # Attention pooling over the k_pad neighbors of each centroid.
        wa = refs[2 * num_layers][...].reshape(1, 1, cout)   # f32
        h3 = h.reshape(tg, k_pad, cout)                      # free view (k_pad % 8 == 0)

        # Scores: VPU multiply + lane reduce (ba omitted: softmax shift-invariant).
        logits = jnp.sum(h3 * wa, axis=-1)                   # (tg, k_pad) f32
        if k_pad != k_real:
            kidx = jax.lax.broadcasted_iota(jnp.int32, (tg, k_pad), 1)
            logits = jnp.where(kidx < k_real, logits, -1e30)  # pads -> prob 0

        m = jnp.max(logits, axis=-1, keepdims=True)
        e = jnp.exp(logits - m)                              # EUP
        denom = jnp.sum(e, axis=-1, keepdims=True)
        p = e * pl.reciprocal(denom, approx=True)            # EUP reciprocal

        # Weighted sum: one VPU multiply + one XLU sublane reduce over K.
        pooled = jnp.sum(h3 * p[:, :, None], axis=1)         # (tg, cout) f32
        out_ref[...] = pooled

    return kernel


# ----------------------------------------------------------------------------
# Wrapper: padding, VMEM-aware tiling, pallas_call
# ----------------------------------------------------------------------------
def run_sa_kernel(grouped, layer_params, wa, ba):
    """grouped: (G, K, Cin) float.  Returns pooled features (G, Cout) f32."""
    G, K, Cin = grouped.shape
    num_layers = len(layer_params)
    Cout = layer_params[-1][0].shape[1]

    # Lane-dense channel padding (multiples of 128) and sublane-friendly K pad.
    cin_pad = _round_up(Cin, 128)
    c_pads = [_round_up(w.shape[1], 128) for (w, _) in layer_params]
    cout_pad = c_pads[-1]
    k_pad = _round_up(max(K, 8), 8)

    # Zero-padded weights / biases (pad rows/cols keep pad activations at 0).
    padded_params = []
    prev = cin_pad
    for (w, b), cp in zip(layer_params, c_pads):
        wp = _pad2(w, (prev, cp)).astype(jnp.bfloat16)
        bp = _pad2(b.reshape(1, -1), (1, cp)).astype(jnp.float32)
        padded_params.append((wp, bp))
        prev = cp
    wa_row = _pad2(wa.reshape(1, -1), (1, cout_pad)).astype(jnp.float32)
    del ba  # scalar shift before a softmax over K is a no-op

    # Generation-aware VMEM budget -> tile size.
    try:
        vmem_bytes = int(pltpu.get_tpu_info().vmem_capacity_bytes)
    except Exception:
        vmem_bytes = 64 * 1024 * 1024                         # conservative default
    c_max = max([cin_pad] + c_pads)
    # Per-centroid working set: double-buffered bf16 input, ~2.5 live f32/bf16
    # activation copies at the widest layer, double-buffered f32 output.
    per_g = k_pad * (4 * cin_pad + 10 * c_max) + 8 * cout_pad
    weight_bytes = 2 * (sum(wp.size * 2 + bp.size * 4 for wp, bp in padded_params)
                        + wa_row.size * 4)
    budget = max(0, vmem_bytes // 2 - weight_bytes)
    tg = (budget // max(per_g, 1)) // 8 * 8
    tg = max(8, min(tg, 2048))
    tg = min(tg, _round_up(G, 8))
    # 64-MiB-VMEM chips (v7x) have 2 TensorCores: keep grid >= 2 when possible.
    if vmem_bytes <= 80 * 1024 * 1024 and G >= 16:
        tg = min(tg, _round_up(pl.cdiv(G, 2), 8))
    G_pad = _round_up(G, tg)

    # Single fused pad (G, K, C) + bf16 cast + matmul-ready 2D reshape.
    x = jnp.pad(grouped.astype(jnp.bfloat16),
                ((0, G_pad - G), (0, k_pad - K), (0, cin_pad - Cin)))
    x2d = x.reshape(G_pad * k_pad, cin_pad)

    kernel = make_sa_kernel(num_layers, tg, K, k_pad, cout_pad)

    in_specs = [pl.BlockSpec((tg * k_pad, cin_pad), lambda i: (i, 0))]
    args = [x2d]
    for wp, bp in padded_params:
        in_specs.append(pl.BlockSpec(wp.shape, lambda i: (0, 0)))
        in_specs.append(pl.BlockSpec(bp.shape, lambda i: (0, 0)))
        args += [wp, bp]
    in_specs.append(pl.BlockSpec(wa_row.shape, lambda i: (0, 0)))
    args.append(wa_row)

    vmem_limit = int(min(vmem_bytes, 128 * 1024 * 1024) * 0.9)
    out = pl.pallas_call(
        kernel,
        grid=(G_pad // tg,),
        in_specs=in_specs,
        out_specs=pl.BlockSpec((tg, cout_pad), lambda i: (i, 0)),
        out_shape=jax.ShapeDtypeStruct((G_pad, cout_pad), jnp.float32),
        compiler_params=pltpu.CompilerParams(
            dimension_semantics=("parallel",),
            vmem_limit_bytes=vmem_limit,
        ),
    )(*args)
    return out[:G, :Cout]


# ----------------------------------------------------------------------------
# Glue (plain JAX): FPS sampling, kNN grouping (data-dependent gathers)
# ----------------------------------------------------------------------------
def farthest_point_sample(xyz, npoint):
    """xyz: (B, N, 3) -> centroid indices (B, npoint), deterministic start=0."""
    B, N, _ = xyz.shape

    def body(i, state):
        centroids, distance, farthest = state
        centroids = centroids.at[:, i].set(farthest)
        centroid = jnp.take_along_axis(xyz, farthest[:, None, None], axis=1)
        dist = jnp.sum((xyz - centroid) ** 2, axis=-1)
        distance = jnp.minimum(distance, dist)
        farthest = jnp.argmax(distance, axis=-1).astype(jnp.int32)
        return centroids, distance, farthest

    centroids = jnp.zeros((B, npoint), dtype=jnp.int32)
    distance = jnp.full((B, N), 1e10, dtype=jnp.float32)
    farthest = jnp.zeros((B,), dtype=jnp.int32)
    centroids, _, _ = jax.lax.fori_loop(0, npoint, body, (centroids, distance, farthest))
    return centroids


def square_distance(src, dst):
    """src: (B,S,3), dst: (B,N,3) -> (B,S,N) squared distances."""
    return jnp.sum((src[:, :, None, :] - dst[:, None, :, :]) ** 2, axis=-1)


def batched_gather(points, idx):
    """points: (B,N,C), idx: (B,S,K) -> (B,S,K,C)."""
    return jax.vmap(lambda pts, ix: pts[ix])(points, idx)


def transition_down_atten(xyz, points, layer_params, wa, ba, npoint, nsample):
    """xyz: (B,N,3), points: (B,N,D) -> (new_xyz (B,S,3), new_points (B,S,Cout))."""
    fps_idx = farthest_point_sample(xyz, npoint)                       # (B,S)
    new_xyz = jnp.take_along_axis(xyz, fps_idx[..., None], axis=1)     # (B,S,3)

    dists = square_distance(new_xyz, xyz)                              # (B,S,N)
    idx = jax.lax.top_k(-dists, nsample)[1]                            # (B,S,K)

    grouped_xyz = batched_gather(xyz, idx) - new_xyz[:, :, None, :]    # (B,S,K,3)
    grouped_pts = batched_gather(points, idx)                          # (B,S,K,D)
    grouped = jnp.concatenate([grouped_xyz, grouped_pts], axis=-1)     # (B,S,K,3+D)

    Bn, S, K, C = grouped.shape
    feats = run_sa_kernel(grouped.reshape(Bn * S, K, C),
                          layer_params, wa, ba)                        # (B*S, Cout)
    return new_xyz, feats.reshape(Bn, S, -1)


# ----------------------------------------------------------------------------
# Plain-JAX reference of the hot path (verification; mimics bf16 MXU matmuls)
# ----------------------------------------------------------------------------
def ref_mlp_atten(grouped, layer_params, wa, ba):
    h = grouped.astype(jnp.float32)                           # (G,K,Cin)
    for w, b in layer_params:
        acc = jnp.einsum("gkc,cd->gkd",
                         h.astype(jnp.bfloat16), w.astype(jnp.bfloat16),
                         preferred_element_type=jnp.float32)
        h = jnp.maximum(acc + b, 0.0)
    logits = jnp.einsum("gkc,c->gk", h, wa[:, 0]) + ba[0, 0]
    p = jax.nn.softmax(logits, axis=-1)
    return jnp.einsum("gk,gkc->gc", p, h)


# ----------------------------------------------------------------------------
if __name__ == "__main__":
    # Small, module-consistent shapes:
    #   B=2 clouds of N=16 points, point features D=13,
    #   TransitionDownAtten(k=8, nneighbor=4, channels=[3+13, 32, 32])
    B, N, D = 2, 16, 13
    npoint, nneighbor = 8, 4
    channels = [3 + D, 32, 32]          # channels[0] = in_channel (includes +3)

    key = jax.random.PRNGKey(0)
    kxyz, kpts, *wkeys = jax.random.split(key, 2 + 2 * len(channels))
    xyz = jax.random.normal(kxyz, (B, N, 3), jnp.float32)
    points = jax.random.normal(kpts, (B, N, D), jnp.float32)

    # Deterministic parameter init (fresh-init semantics).  Eval-mode BatchNorm
    # with default stats (mean=0, var=1, gamma=1, beta=0) folded into conv
    # weight/bias: scale = 1/sqrt(var+eps).
    bn_scale = 1.0 / jnp.sqrt(1.0 + 1e-5)
    layer_params = []
    last = channels[0]
    for li, cout in enumerate(channels[1:]):
        w = jax.random.normal(wkeys[2 * li], (last, cout), jnp.float32) * (2.0 / last) ** 0.5
        b = jax.random.normal(wkeys[2 * li + 1], (1, cout), jnp.float32) * 0.01
        layer_params.append((w * bn_scale, b * bn_scale))
        last = cout
    wa = jax.random.normal(wkeys[-2], (last, 1), jnp.float32) * (1.0 / last) ** 0.5
    ba = jnp.zeros((1, 1), jnp.float32)

    new_xyz, new_points = jax.jit(
        functools.partial(transition_down_atten, npoint=npoint, nsample=nneighbor)
    )(xyz, points, layer_params, wa, ba)
    jax.block_until_ready((new_xyz, new_points))

    assert new_xyz.shape == (B, npoint, 3)
    assert new_points.shape == (B, npoint, channels[-1])

    # Verify the Pallas hot path against a plain-JAX reference on the same
    # grouped features (tolerance accounts for bf16 matmuls + approx recip).
    fps_idx = farthest_point_sample(xyz, npoint)
    nxyz = jnp.take_along_axis(xyz, fps_idx[..., None], axis=1)
    idx = jax.lax.top_k(-square_distance(nxyz, xyz), nneighbor)[1]
    grouped = jnp.concatenate(
        [batched_gather(xyz, idx) - nxyz[:, :, None, :], batched_gather(points, idx)],
        axis=-1,
    ).reshape(B * npoint, nneighbor, channels[0])
    ref = ref_mlp_atten(grouped, layer_params, wa, ba).reshape(B, npoint, -1)

    assert jnp.allclose(new_points, ref, atol=5e-2, rtol=5e-2), (
        float(jnp.max(jnp.abs(new_points - ref)))
    )
    print("KERNEL_OK")
</pallas_src>

<mosaic_0001>
module attributes {stable_mosaic.version = 11 : i64} {
  func.func @kernel(%arg0: i32, %arg1: memref<64x128xbf16, #tpu.memory_space<vmem>>, %arg2: memref<128x128xbf16, #tpu.memory_space<vmem>>, %arg3: memref<1x128xf32, #tpu.memory_space<vmem>>, %arg4: memref<128x128xbf16, #tpu.memory_space<vmem>>, %arg5: memref<1x128xf32, #tpu.memory_space<vmem>>, %arg6: memref<1x128xf32, #tpu.memory_space<vmem>>, %arg7: memref<8x128xf32, #tpu.memory_space<vmem>>) attributes {dimension_semantics = [#tpu.dimension_semantics<parallel>], iteration_bounds = array<i64: 2>, scalar_prefetch = 0 : i64, scratch_operands = 0 : i64, tpu.core_type = #tpu.core_type<tc>, window_params = [{transform_indices = @transform_0, window_bounds = array<i64: 64, 128>}, {pipeline_mode = #tpu.pipeline_mode<synchronous>, transform_indices = @transform_1, window_bounds = array<i64: 128, 128>}, {pipeline_mode = #tpu.pipeline_mode<synchronous>, transform_indices = @transform_2, window_bounds = array<i64: 1, 128>}, {pipeline_mode = #tpu.pipeline_mode<synchronous>, transform_indices = @transform_3, window_bounds = array<i64: 128, 128>}, {pipeline_mode = #tpu.pipeline_mode<synchronous>, transform_indices = @transform_4, window_bounds = array<i64: 1, 128>}, {pipeline_mode = #tpu.pipeline_mode<synchronous>, transform_indices = @transform_5, window_bounds = array<i64: 1, 128>}, {transform_indices = @transform_6, window_bounds = array<i64: 8, 128>}]} {
    %c0 = arith.constant 0 : index
    %c0_0 = arith.constant 0 : index
    %0 = vector.load %arg1[%c0, %c0_0] : memref<64x128xbf16, #tpu.memory_space<vmem>>, vector<64x128xbf16>
    %c0_1 = arith.constant 0 : index
    %c0_2 = arith.constant 0 : index
    %1 = vector.load %arg2[%c0_1, %c0_2] : memref<128x128xbf16, #tpu.memory_space<vmem>>, vector<128x128xbf16>
    %c0_3 = arith.constant 0 : index
    %c0_4 = arith.constant 0 : index
    %2 = vector.load %arg3[%c0_3, %c0_4] : memref<1x128xf32, #tpu.memory_space<vmem>>, vector<1x128xf32>
    %cst = arith.constant dense<0.000000e+00> : vector<64x128xf32>
    %3 = tpu.matmul %0, %1, %cst {dimension_numbers = #tpu.dot_dimension_numbers<[1], [0], [0], [1], [0, 0, 1, 1], [], []>} : vector<64x128xbf16>, vector<128x128xbf16>, vector<64x128xf32> -> vector<64x128xf32>
    %4 = vector.broadcast %2 : vector<1x128xf32> to vector<64x128xf32>
    %5 = arith.addf %3, %4 : vector<64x128xf32>
    %cst_5 = arith.constant 0.000000e+00 : f32
    %6 = vector.broadcast %cst_5 : f32 to vector<64x128xf32>
    %7 = arith.maximumf %5, %6 : vector<64x128xf32>
    %8 = arith.truncf %7 : vector<64x128xf32> to vector<64x128xbf16>
    %c0_6 = arith.constant 0 : index
    %c0_7 = arith.constant 0 : index
    %9 = vector.load %arg4[%c0_6, %c0_7] : memref<128x128xbf16, #tpu.memory_space<vmem>>, vector<128x128xbf16>
    %c0_8 = arith.constant 0 : index
    %c0_9 = arith.constant 0 : index
    %10 = vector.load %arg5[%c0_8, %c0_9] : memref<1x128xf32, #tpu.memory_space<vmem>>, vector<1x128xf32>
    %cst_10 = arith.constant dense<0.000000e+00> : vector<64x128xf32>
    %11 = tpu.matmul %8, %9, %cst_10 {dimension_numbers = #tpu.dot_dimension_numbers<[1], [0], [0], [1], [0, 0, 1, 1], [], []>} : vector<64x128xbf16>, vector<128x128xbf16>, vector<64x128xf32> -> vector<64x128xf32>
    %12 = vector.broadcast %10 : vector<1x128xf32> to vector<64x128xf32>
    %13 = arith.addf %11, %12 : vector<64x128xf32>
    %cst_11 = arith.constant 0.000000e+00 : f32
    %14 = vector.broadcast %cst_11 : f32 to vector<64x128xf32>
    %15 = arith.maximumf %13, %14 : vector<64x128xf32>
    %c0_12 = arith.constant 0 : index
    %c0_13 = arith.constant 0 : index
    %16 = vector.load %arg6[%c0_12, %c0_13] : memref<1x128xf32, #tpu.memory_space<vmem>>, vector<1x128xf32>
    %17 = vector.shape_cast %16 : vector<1x128xf32> to vector<1x1x128xf32>
    %18 = vector.shape_cast %15 : vector<64x128xf32> to vector<8x8x128xf32>
    %19 = vector.broadcast %17 : vector<1x1x128xf32> to vector<8x8x128xf32>
    %20 = arith.mulf %18, %19 : vector<8x8x128xf32>
    %cst_14 = arith.constant dense<0.000000e+00> : vector<8x8xf32>
    %21 = vector.multi_reduction <add>, %20, %cst_14 [2] : vector<8x8x128xf32> to vector<8x8xf32>
    %22 = tpu.iota {dimensions = array<i32: 1>} : vector<8x8xi32>
    %c4_i32 = arith.constant 4 : i32
    %23 = vector.broadcast %c4_i32 : i32 to vector<8x8xi32>
    %24 = arith.cmpi slt, %22, %23 : vector<8x8xi32>
    %cst_15 = arith.constant -1.000000e+30 : f32
    %25 = vector.broadcast %cst_15 : f32 to vector<8x8xf32>
    %26 = arith.select %24, %21, %25 : vector<8x8xi1>, vector<8x8xf32>
    %cst_16 = arith.constant dense<0xFF800000> : vector<8xf32>
    %27 = vector.multi_reduction <maximumf>, %26, %cst_16 [1] : vector<8x8xf32> to vector<8xf32>
    %28 = vector.shape_cast %27 : vector<8xf32> to vector<8x1xf32>
    %29 = vector.broadcast %28 : vector<8x1xf32> to vector<8x8xf32>
    %30 = arith.subf %26, %29 : vector<8x8xf32>
    %31 = math.exp %30 : vector<8x8xf32>
    %cst_17 = arith.constant dense<0.000000e+00> : vector<8xf32>
    %32 = vector.multi_reduction <add>, %31, %cst_17 [1] : vector<8x8xf32> to vector<8xf32>
    %33 = vector.shape_cast %32 : vector<8xf32> to vector<8x1xf32>
    %34 = tpu.reciprocal %33 {approx = true} : vector<8x1xf32> -> vector<8x1xf32>
    %35 = vector.broadcast %34 : vector<8x1xf32> to vector<8x8xf32>
    %36 = arith.mulf %31, %35 : vector<8x8xf32>
    %37 = vector.shape_cast %36 : vector<8x8xf32> to vector<8x8x1xf32>
    %38 = vector.broadcast %37 : vector<8x8x1xf32> to vector<8x8x128xf32>
    %39 = arith.mulf %18, %38 : vector<8x8x128xf32>
    %cst_18 = arith.constant dense<0.000000e+00> : vector<8x128xf32>
    %40 = vector.multi_reduction <add>, %39, %cst_18 [1] : vector<8x8x128xf32> to vector<8x128xf32>
    %c0_19 = arith.constant 0 : index
    %c0_20 = arith.constant 0 : index
    %41 = vector.load %arg7[%c0_19, %c0_20] : memref<8x128xf32, #tpu.memory_space<vmem>>, vector<8x128xf32>
    tpu.vector_store %arg7[%c0_19, %c0_20], %40 {strides = array<i32>} : memref<8x128xf32, #tpu.memory_space<vmem>>, vector<8x128xf32>,
    return
  }
  func.func @transform_0(%arg0: i32) -> (i32, i32) {
    %c0_i32 = arith.constant 0 : i32
    %c0_i32_0 = arith.constant 0 : i32
    return %arg0, %c0_i32 : i32, i32
  }
  func.func @transform_1(%arg0: i32) -> (i32, i32) {
    %c0_i32 = arith.constant 0 : i32
    %c0_i32_0 = arith.constant 0 : i32
    %c0_i32_1 = arith.constant 0 : i32
    return %c0_i32, %c0_i32_0 : i32, i32
  }
  func.func @transform_2(%arg0: i32) -> (i32, i32) {
    %c0_i32 = arith.constant 0 : i32
    %c0_i32_0 = arith.constant 0 : i32
    %c0_i32_1 = arith.constant 0 : i32
    return %c0_i32, %c0_i32_0 : i32, i32
  }
  func.func @transform_3(%arg0: i32) -> (i32, i32) {
    %c0_i32 = arith.constant 0 : i32
    %c0_i32_0 = arith.constant 0 : i32
    %c0_i32_1 = arith.constant 0 : i32
    return %c0_i32, %c0_i32_0 : i32, i32
  }
  func.func @transform_4(%arg0: i32) -> (i32, i32) {
    %c0_i32 = arith.constant 0 : i32
    %c0_i32_0 = arith.constant 0 : i32
    %c0_i32_1 = arith.constant 0 : i32
    return %c0_i32, %c0_i32_0 : i32, i32
  }
  func.func @transform_5(%arg0: i32) -> (i32, i32) {
    %c0_i32 = arith.constant 0 : i32
    %c0_i32_0 = arith.constant 0 : i32
    %c0_i32_1 = arith.constant 0 : i32
    return %c0_i32, %c0_i32_0 : i32, i32
  }
  func.func @transform_6(%arg0: i32) -> (i32, i32) {
    %c0_i32 = arith.constant 0 : i32
    %c0_i32_0 = arith.constant 0 : i32
    return %arg0, %c0_i32 : i32, i32
  }
}

</mosaic_0001>

<llo_original>
// kernel: custom-call.8
$region0: #{custom-call.8}
  %s0 = inlined_call_operand.vmem [shape: f32[2,16], index: 0, kind: output, shape index: {}]

// kernel: neg.1
$region0: #{neg.1}
  #allocation0 [shape = 's32[1]{0}', space=sflag, size = 0x4, scoped, tag = 'scoped memory for neg.1']
  %s0 = inlined_call_operand.vmem [shape: f32[2,8,16], index: 0, kind: input, shape index: {}]
  %s1 = inlined_call_operand.vmem [shape: f32[2,8,16], index: 1, kind: output, shape index: {}]
  %v2 = vld [vmem:[%s0] sm:$0xff]
  %3 = xla_tuple %v2
  %4 = xla_tuple %3
  %v5 = vxor.u32 %v2, 2147483648
  %6 = xla_tuple %v5
  %7 = vst [vmem:[%s1] sm:$0xff] %v5
  %s8 = scalar_lea.vmem %s0, 8
  %v9 = vld [vmem:[%s8] sm:$0xff]
  %10 = xla_tuple %v9
  %11 = xla_tuple %10
  %v12 = vxor.u32 %v9, 2147483648
  %13 = xla_tuple %v12
  %s14 = scalar_lea.vmem %s1, 8
  %15 = vst [vmem:[%s14] sm:$0xff] %v12

// kernel: transition_down_atten.1
$region0: #{transition_down_atten.1}
  #allocation0 [shape = 'u32[]', space=smem, size = 0x4, offset = 0x4, fixed_abs, tag = 'smem constant byte address 0x4 - core index']
  #allocation1 [shape = 'u32[144,128]{1,0:T(1,128)}', space=vmem, size = 0x12000, scoped, tag = 'internal scratch']
  %s0 = inlined_call_operand.vmem [shape: bf16[128,128], index: 0, kind: input, shape index: {}]
  %s1 = inlined_call_operand.vmem [shape: bf16[128,128], index: 1, kind: input, shape index: {}]
  %s2 = inlined_call_operand.vmem [shape: f32[1,128], index: 2, kind: input, shape index: {}]
  %s3 = inlined_call_operand.vmem [shape: bf16[128,128], index: 3, kind: input, shape index: {}]
  %s4 = inlined_call_operand.vmem [shape: f32[1,128], index: 4, kind: input, shape index: {}]
  %s5 = inlined_call_operand.vmem [shape: f32[1,128], index: 5, kind: input, shape index: {}]
  %s6 = inlined_call_operand.vmem [shape: f32[16,128], index: 6, kind: output, shape index: {}]
  %s7 = sld [smem:[#allocation0]]
  $region57: #{transition_down_atten.1} parent=0
    _
  %s9 = ssub.s32 1, %s7
  %s10 = scalar_select 0, %s9, %s7
  loop: start=0, step=1, limit=4
  $region2: #{transition_down_atten.1} parent=0 // loop_pre_header
    _
  $region3: #{transition_down_atten.1} parent=0 // loop_header
    %s12 = sphi 0, %s16
    %p13 = scmp.ge.s32.totalorder %s12, 4
    %s22 = sphi 0, %s24
    %s25 = sphi 0, %s22
    %s26 = sphi 0, %s25
    %s42 = sphi 0, %s26
    %s46 = sphi 0, %s46
    %s48 = sphi 0, %s46
    %s49 = sphi 0, %s48
    %s63 = sphi 0, %s49
    %s67 = sphi 0, %s67
    %s69 = sphi 0, %s67
    %s70 = sphi 0, %s69
    %s84 = sphi 0, %s70
    %s88 = sphi 0, %s88
    %s90 = sphi 0, %s88
    %s91 = sphi 0, %s90
    %s105 = sphi 0, %s91
    %s109 = sphi 0, %s109
    %s111 = sphi 0, %s109
    %s112 = sphi 0, %s111
    %s126 = sphi 0, %s112
    %s130 = sphi 0, %s130
    %s132 = sphi 0, %s130
    %s133 = sphi 0, %s132
    %s147 = sphi 0, %s133
    %s153 = sphi 0, %s155
    %s156 = sphi 0, %s153
    %s157 = sphi 0, %s156
    %s173 = sphi 0, %s157
  $region4: #{transition_down_atten.1} parent=0 // loop_header_branch
    %15 = sbr.rel (%p13) target = $region8
  $region5: #{transition_down_atten.1} parent=0 // loop_body
    %s17 = ssub.s32 %s12, 1
    %s18 = ssub.s32 %s12, 2
    %s19 = sadd.s32 %s12, 1
    %s20 = ssub.s32 %s12, %s19
    %p21 = scmp.eq.s32.totalorder %s20, 0
    %s23 = sadd.s32 %s22, 1
    %s24 = scalar_select %p21, %s22, %s23
    %p27 = pneg %p21
    %p28 = scmp.eq.s32.totalorder %s12, 1
    %p29 = por %p27, %p28
    %p30 = scmp.ne.s32.totalorder %s22, %s25
    %p31 = scmp.eq.s32.totalorder %s12, 0
    %p32 = por %p30, %p31
    %p33 = scmp.ne.s32.totalorder %s22, %s25
    %p34 = scmp.eq.s32.totalorder %s17, 1
    %p35 = por %p33, %p34
    %p36 = scmp.ne.s32.totalorder %s25, %s26
    %p37 = scmp.eq.s32.totalorder %s17, 0
    %p38 = por %p36, %p37
    %p39 = scmp.ne.s32.totalorder %s25, %s26
    %p40 = scmp.eq.s32.totalorder %s18, 1
    %p41 = por %p39, %p40
    %p43 = scmp.ne.s32.totalorder %s26, %s42
    %p44 = scmp.eq.s32.totalorder %s18, 0
    %p45 = por %p43, %p44
    %s47 = sadd.s32 %s46, 1
    %p50 = scmp.eq.s32.totalorder %s12, 1
    %p51 = scmp.ne.s32.totalorder %s46, %s48
    %p52 = scmp.eq.s32.totalorder %s12, 0
    %p53 = por %p51, %p52
    %p54 = scmp.ne.s32.totalorder %s46, %s48
    %p55 = scmp.eq.s32.totalorder %s17, 1
    %p56 = por %p54, %p55
    %p57 = scmp.ne.s32.totalorder %s48, %s49
    %p58 = scmp.eq.s32.totalorder %s17, 0
    %p59 = por %p57, %p58
    %p60 = scmp.ne.s32.totalorder %s48, %s49
    %p61 = scmp.eq.s32.totalorder %s18, 1
    %p62 = por %p60, %p61
    %p64 = scmp.ne.s32.totalorder %s49, %s63
    %p65 = scmp.eq.s32.totalorder %s18, 0
    %p66 = por %p64, %p65
    %s68 = sadd.s32 %s67, 1
    %p71 = scmp.eq.s32.totalorder %s12, 1
    %p72 = scmp.ne.s32.totalorder %s67, %s69
    %p73 = scmp.eq.s32.totalorder %s12, 0
    %p74 = por %p72, %p73
    %p75 = scmp.ne.s32.totalorder %s67, %s69
    %p76 = scmp.eq.s32.totalorder %s17, 1
    %p77 = por %p75, %p76
    %p78 = scmp.ne.s32.totalorder %s69, %s70
    %p79 = scmp.eq.s32.totalorder %s17, 0
    %p80 = por %p78, %p79
    %p81 = scmp.ne.s32.totalorder %s69, %s70
    %p82 = scmp.eq.s32.totalorder %s18, 1
    %p83 = por %p81, %p82
    %p85 = scmp.ne.s32.totalorder %s70, %s84
    %p86 = scmp.eq.s32.totalorder %s18, 0
    %p87 = por %p85, %p86
    %s89 = sadd.s32 %s88, 1
    %p92 = scmp.eq.s32.totalorder %s12, 1
    %p93 = scmp.ne.s32.totalorder %s88, %s90
    %p94 = scmp.eq.s32.totalorder %s12, 0
    %p95 = por %p93, %p94
    %p96 = scmp.ne.s32.totalorder %s88, %s90
    %p97 = scmp.eq.s32.totalorder %s17, 1
    %p98 = por %p96, %p97
    %p99 = scmp.ne.s32.totalorder %s90, %s91
    %p100 = scmp.eq.s32.totalorder %s17, 0
    %p101 = por %p99, %p100
    %p102 = scmp.ne.s32.totalorder %s90, %s91
    %p103 = scmp.eq.s32.totalorder %s18, 1
    %p104 = por %p102, %p103
    %p106 = scmp.ne.s32.totalorder %s91, %s105
    %p107 = scmp.eq.s32.totalorder %s18, 0
    %p108 = por %p106, %p107
    %s110 = sadd.s32 %s109, 1
    %p113 = scmp.eq.s32.totalorder %s12, 1
    %p114 = scmp.ne.s32.totalorder %s109, %s111
    %p115 = scmp.eq.s32.totalorder %s12, 0
    %p116 = por %p114, %p115
    %p117 = scmp.ne.s32.totalorder %s109, %s111
    %p118 = scmp.eq.s32.totalorder %s17, 1
    %p119 = por %p117, %p118
    %p120 = scmp.ne.s32.totalorder %s111, %s112
    %p121 = scmp.eq.s32.totalorder %s17, 0
    %p122 = por %p120, %p121
    %p123 = scmp.ne.s32.totalorder %s111, %s112
    %p124 = scmp.eq.s32.totalorder %s18, 1
    %p125 = por %p123, %p124
    %p127 = scmp.ne.s32.totalorder %s112, %s126
    %p128 = scmp.eq.s32.totalorder %s18, 0
    %p129 = por %p127, %p128
    %s131 = sadd.s32 %s130, 1
    %p134 = scmp.eq.s32.totalorder %s12, 1
    %p135 = scmp.ne.s32.totalorder %s130, %s132
    %p136 = scmp.eq.s32.totalorder %s12, 0
    %p137 = por %p135, %p136
    %p138 = scmp.ne.s32.totalorder %s130, %s132
    %p139 = scmp.eq.s32.totalorder %s17, 1
    %p140 = por %p138, %p139
    %p141 = scmp.ne.s32.totalorder %s132, %s133
    %p142 = scmp.eq.s32.totalorder %s17, 0
    %p143 = por %p141, %p142
    %p144 = scmp.ne.s32.totalorder %s132, %s133
    %p145 = scmp.eq.s32.totalorder %s18, 1
    %p146 = por %p144, %p145
    %p148 = scmp.ne.s32.totalorder %s133, %s147
    %p149 = scmp.eq.s32.totalorder %s18, 0
    %p150 = por %p148, %p149
    %s151 = ssub.s32 %s12, %s19
    %p152 = scmp.eq.s32.totalorder %s151, 0
    %s154 = sadd.s32 %s153, 1
    %s155 = scalar_select %p152, %s153, %s154
    %p158 = pneg %p152
    %p159 = scmp.eq.s32.totalorder %s12, 1
    %p160 = por %p158, %p159
    %p161 = scmp.ne.s32.totalorder %s153, %s156
    %p162 = scmp.eq.s32.totalorder %s12, 0
    %p163 = por %p161, %p162
    %p164 = scmp.ne.s32.totalorder %s153, %s156
    %p165 = scmp.eq.s32.totalorder %s17, 1
    %p166 = por %p164, %p165
    %p167 = scmp.ne.s32.totalorder %s156, %s157
    %p168 = scmp.eq.s32.totalorder %s17, 0
    %p169 = por %p167, %p168
    %p170 = scmp.ne.s32.totalorder %s156, %s157
    %p171 = scmp.eq.s32.totalorder %s18, 1
    %p172 = por %p170, %p171
    %p174 = scmp.ne.s32.totalorder %s157, %s173
    %p175 = scmp.eq.s32.totalorder %s18, 0
    %p176 = por %p174, %p175
    %p177 = scmp.le.s32.totalorder 1, %s12
    %p178 = scmp.lt.s32.totalorder %s12, 3
    %p179 = pnand %p177, %p178
    %p180 = pneg %p179
    // Predicated region
    $region9: #{transition_down_atten.1} parent=5 // pred_check
      _
    $region10: #{transition_down_atten.1} parent=5 // pred_check_branch
      %182 = sbr.rel (%p179) target = $region12
    $region11: #{transition_down_atten.1} parent=5 // pred_region
      %s183 = ssub.s32 %s12, 1
      // Predicated region
      $region13: #{transition_down_atten.1} parent=11 // pred_check
        %p184 = pneg %p59
      $region14: #{transition_down_atten.1} parent=11 // pred_check_branch
        %186 = sbr.rel (%p184) target = $region16
      $region15: #{transition_down_atten.1} parent=11 // pred_region
        _
      $region16: #{transition_down_atten.1} parent=11 // pred_fallthru
        _
      // Predicated region
      $region17: #{transition_down_atten.1} parent=11 // pred_check
        %p187 = pneg %p80
      $region18: #{transition_down_atten.1} parent=11 // pred_check_branch
        %189 = sbr.rel (%p187) target = $region20
      $region19: #{transition_down_atten.1} parent=11 // pred_region
        _
      $region20: #{transition_down_atten.1} parent=11 // pred_fallthru
        _
      // Predicated region
      $region21: #{transition_down_atten.1} parent=11 // pred_check
        %p190 = pneg %p101
      $region22: #{transition_down_atten.1} parent=11 // pred_check_branch
        %192 = sbr.rel (%p190) target = $region24
      $region23: #{transition_down_atten.1} parent=11 // pred_region
        _
      $region24: #{transition_down_atten.1} parent=11 // pred_fallthru
        _
      // Predicated region
      $region25: #{transition_down_atten.1} parent=11 // pred_check
        %p193 = pneg %p122
      $region26: #{transition_down_atten.1} parent=11 // pred_check_branch
        %195 = sbr.rel (%p193) target = $region28
      $region27: #{transition_down_atten.1} parent=11 // pred_region
        _
      $region28: #{transition_down_atten.1} parent=11 // pred_fallthru
        _
      // Predicated region
      $region29: #{transition_down_atten.1} parent=11 // pred_check
        %p196 = pneg %p143
      $region30: #{transition_down_atten.1} parent=11 // pred_check_branch
        %198 = sbr.rel (%p196) target = $region32
      $region31: #{transition_down_atten.1} parent=11 // pred_region
        _
      $region32: #{transition_down_atten.1} parent=11 // pred_fallthru
        _
    $region12: #{transition_down_atten.1} parent=5 // pred_fallthru
      _
    %p199 = scmp.lt.s32.totalorder %s12, 2
    // Predicated region
    $region33: #{transition_down_atten.1} parent=5 // pred_check
      %p200 = pneg %p199
    $region34: #{transition_down_atten.1} parent=5 // pred_check_branch
      %202 = sbr.rel (%p200) target = $region36
    $region35: #{transition_down_atten.1} parent=5 // pred_region
      // Predicated region
      $region37: #{transition_down_atten.1} parent=35 // pred_check
        %p203 = pneg %p32
      $region38: #{transition_down_atten.1} parent=35 // pred_check_branch
        %205 = sbr.rel (%p203) target = $region40
      $region39: #{transition_down_atten.1} parent=35 // pred_region
        %s206 = smul.u32 8, %s12
        %p207 = scmp.lt.s32.totalorder %s206, 15
        %s208 = scalar_select %p207, %s206, 15
        %s209 = smul.addr %s208, 4
        %s210 = scalar_lea.vmem %s0, %s209
        %s211 = smul.u32 8, %s12
      $region40: #{transition_down_atten.1} parent=35 // pred_fallthru
        _
    $region36: #{transition_down_atten.1} parent=5 // pred_fallthru
      _
    %p212 = scmp.le.s32.totalorder 1, %s12
    %p213 = scmp.lt.s32.totalorder %s12, 3
    %p214 = pnand %p212, %p213
    %p215 = pneg %p214
    // Predicated region
    $region41: #{transition_down_atten.1} parent=5 // pred_check
      _
    $region42: #{transition_down_atten.1} parent=5 // pred_check_branch
      %217 = sbr.rel (%p214) target = $region44
    $region43: #{transition_down_atten.1} parent=5 // pred_region
      %s218 = ssub.s32 %s12, 1
      %s219 = smul.u32 8, %s17
      %p220 = scmp.lt.s32.totalorder %s219, 15
      %s221 = scalar_select %p220, %s219, 15
      %s222 = smul.addr %s221, 4
      %s223 = scalar_lea.vmem %s0, %s222
      %p224 = pneg %p38
      %p225 = pneg %p35
      %p226 = pneg %p59
      %p227 = pneg %p56
      %p228 = pneg %p80
      %p229 = pneg %p77
      %p230 = pneg %p101
      %p231 = pneg %p98
      %p232 = pneg %p122
      %p233 = pneg %p119
      %p234 = pneg %p143
      %p235 = pneg %p140
      %p236 = pneg %p169
      %p237 = pneg %p166
      %p238 = scmp.lt.s32.totalorder %s17, 1
      %s239 = scalar_select %p238, %s17, 1
      %s240 = smul.addr %s239, 8
      %s241 = scalar_lea.vmem %s6, %s240
      %s242 = smul.u32 8, %s17
      %p243 = scmp.lt.s32.totalorder %s242, 15
      %s244 = scalar_select %p243, %s242, 15
      %s245 = smul.addr %s244, 4
      %s246 = scalar_lea.vmem %s0, %s245
      %s247 = smul.u32 8, %s17
      %p248 = scmp.lt.s32.totalorder %s17, 1
      %s249 = scalar_select %p248, %s17, 1
      %s250 = smul.addr %s249, 8
      %s251 = scalar_lea.vmem %s6, %s250
      %v253 = vld [vmem:[%s246] sm:$0xf]
      %v254 = vld [vmem:[%s246 + $0x4] sm:$0xf]
      %v255 = vld [vmem:[%s246 + $0x8] sm:$0xf]
      %v256 = vld [vmem:[%s246 + $0xc] sm:$0xf]
      %v257 = vld [vmem:[%s246 + $0x10] sm:$0xf]
      %v258 = vld [vmem:[%s246 + $0x14] sm:$0xf]
      %v259 = vld [vmem:[%s246 + $0x18] sm:$0xf]
      %v260 = vld [vmem:[%s246 + $0x1c] sm:$0xf]
      %v261 = vld [vmem:[%s1] sm:$0xf]
      %v262 = vld [vmem:[%s1 + $0x4] sm:$0xf]
      %v263 = vld [vmem:[%s1 + $0x8] sm:$0xf]
      %v264 = vld [vmem:[%s1 + $0xc] sm:$0xf]
      %v265 = vld [vmem:[%s1 + $0x10] sm:$0xf]
      %v266 = vld [vmem:[%s1 + $0x14] sm:$0xf]
      %v267 = vld [vmem:[%s1 + $0x18] sm:$0xf]
      %v268 = vld [vmem:[%s1 + $0x1c] sm:$0xf]
      %v269 = vld [vmem:[%s1 + $0x20] sm:$0xf]
      %v270 = vld [vmem:[%s1 + $0x24] sm:$0xf]
      %v271 = vld [vmem:[%s1 + $0x28] sm:$0xf]
      %v272 = vld [vmem:[%s1 + $0x2c] sm:$0xf]
      %v273 = vld [vmem:[%s1 + $0x30] sm:$0xf]
      %v274 = vld [vmem:[%s1 + $0x34] sm:$0xf]
      %v275 = vld [vmem:[%s1 + $0x38] sm:$0xf]
      %v276 = vld [vmem:[%s1 + $0x3c] sm:$0xf]
      %v277 = vld [vmem:[%s2] sm:$0x1]
      %v279 = vlaneseq
      %v280 = vshrl.u32 %v279, 7
      %v281 = vsub.s32 0, %v280
      %v282 = vrot.slane %v277, %v281
      %v292 = vunpack.c.l.b16 %v253
      %v293 = vunpack.c.l.b16 %v254
      %v294 = vunpack.c.l.b16 %v255
      %v295 = vunpack.c.l.b16 %v256
      %v296 = vunpack.c.l.b16 %v257
      %v297 = vunpack.c.l.b16 %v258
      %v298 = vunpack.c.l.b16 %v259
      %v299 = vunpack.c.l.b16 %v260
      %v300 = vpack.c.b16 %v293, %v292
      %v301 = vpack.c.b16 %v295, %v294
      %v302 = vpack.c.b16 %v297, %v296
      %v303 = vpack.c.b16 %v299, %v298
      %v324 = vunpack.c.l.b16 %v261
      %v325 = vunpack.c.l.b16 %v262
      %v326 = vunpack.c.l.b16 %v263
      %v327 = vunpack.c.l.b16 %v264
      %v328 = vunpack.c.l.b16 %v265
      %v329 = vunpack.c.l.b16 %v266
      %v330 = vunpack.c.l.b16 %v267
      %v331 = vunpack.c.l.b16 %v268
      %v332 = vunpack.c.l.b16 %v269
      %v333 = vunpack.c.l.b16 %v270
      %v334 = vunpack.c.l.b16 %v271
      %v335 = vunpack.c.l.b16 %v272
      %v336 = vunpack.c.l.b16 %v273
      %v337 = vunpack.c.l.b16 %v274
      %v338 = vunpack.c.l.b16 %v275
      %v339 = vunpack.c.l.b16 %v276
      %v340 = vpack.c.b16 %v325, %v324
      %v341 = vpack.c.b16 %v327, %v326
      %v342 = vpack.c.b16 %v329, %v328
      %v343 = vpack.c.b16 %v331, %v330
      %v344 = vpack.c.b16 %v333, %v332
      %v345 = vpack.c.b16 %v335, %v334
      %v346 = vpack.c.b16 %v337, %v336
      %v347 = vpack.c.b16 %v339, %v338
      %356 = vmatprep.subr.bf16.mxu0 0
      %357 = vmatpush1.bf16.msra.mxu0 %v340
      %358 = vmatprep.subr.bf16.mxu0 0
      %359 = vmatpush1.bf16.msra.mxu0 %v341
      %360 = vmatprep.subr.bf16.mxu0 0
      %361 = vmatpush1.bf16.msra.mxu0 %v342
      %362 = vmatprep.subr.bf16.mxu0 0
      %363 = vmatpush1.bf16.msra.mxu0 %v343
      %364 = vmatprep.subr.bf16.mxu0 0
      %365 = vmatpush1.bf16.msra.mxu0 %v344
      %366 = vmatprep.subr.bf16.mxu0 0
      %367 = vmatpush1.bf16.msra.mxu0 %v345
      %368 = vmatprep.subr.bf16.mxu0 0
      %369 = vmatpush1.bf16.msra.mxu0 %v346
      %370 = vmatprep.subr.bf16.mxu0 0
      %371 = vmatpush1.bf16.msra.mxu0 %v347
      %372 = vmatprep.subr.bf16.mxu0 0
      %373 = vmatpush1.bf16.msra.mxu0 0
      %374 = vmatprep.subr.bf16.mxu0 0
      %375 = vmatpush1.bf16.msra.mxu0 0
      %376 = vmatprep.subr.bf16.mxu0 0
      %377 = vmatpush1.bf16.msra.mxu0 0
      %378 = vmatprep.subr.bf16.mxu0 0
      %379 = vmatpush1.bf16.msra.mxu0 0
      %380 = vmatprep.subr.bf16.mxu0 0
      %381 = vmatpush1.bf16.msra.mxu0 0
      %382 = vmatprep.subr.bf16.mxu0 0
      %383 = vmatpush1.bf16.msra.mxu0 0
      %384 = vmatprep.subr.bf16.mxu0 0
      %385 = vmatpush1.bf16.msra.mxu0 0
      %386 = vmatprep.subr.bf16.mxu0 0
      %387 = vmatpush1.bf16.msra.mxu0 0
      %388 = vmatprep.mubr.bf16.mxu0 0
      %389 = vmatmul.mubr.bf16.gmra.mrb[0].mxu0 %v300
      %v390 = vpop.f32.mrb[0].mxu0
      %v391 = vadd.f32 %v282, %v390
      %v392 = vpop.f32.mrb[0].mxu0
      %v393 = vpop.f32.mrb[0].mxu0
      %v394 = vadd.f32 %v282, %v393
      %v395 = vpop.f32.mrb[0].mxu0
      %396 = vmatprep.mubr.bf16.mxu0 0
      %397 = vmatmul.mubr.bf16.gmra.mrb[0].mxu0 %v301
      %v398 = vpop.f32.mrb[0].mxu0
      %v399 = vadd.f32 %v282, %v398
      %v400 = vpop.f32.mrb[0].mxu0
      %v401 = vpop.f32.mrb[0].mxu0
      %v402 = vadd.f32 %v282, %v401
      %v403 = vpop.f32.mrb[0].mxu0
      %404 = vmatprep.mubr.bf16.mxu0 0
      %405 = vmatmul.mubr.bf16.gmra.mrb[0].mxu0 %v302
      %v406 = vpop.f32.mrb[0].mxu0
      %v407 = vadd.f32 %v282, %v406
      %v408 = vpop.f32.mrb[0].mxu0
      %v409 = vpop.f32.mrb[0].mxu0
      %v410 = vadd.f32 %v282, %v409
      %v411 = vpop.f32.mrb[0].mxu0
      %412 = vmatprep.mubr.bf16.mxu0 0
      %413 = vmatmul.mubr.bf16.gmra.mrb[0].mxu0 %v303
      %v414 = vpop.f32.mrb[0].mxu0
      %v415 = vadd.f32 %v282, %v414
      %v416 = vpop.f32.mrb[0].mxu0
      %v417 = vpop.f32.mrb[0].mxu0
      %v418 = vadd.f32 %v282, %v417
      %v419 = vpop.f32.mrb[0].mxu0
      %420 = vdwg.mxu0
      %v421 = vmax.f32 %v391, 0.0
      %v422 = vmax.f32 %v394, 0.0
      %v423 = vmax.f32 %v399, 0.0
      %v424 = vmax.f32 %v402, 0.0
      %v425 = vmax.f32 %v407, 0.0
      %v426 = vmax.f32 %v410, 0.0
      %v427 = vmax.f32 %v415, 0.0
      %v428 = vmax.f32 %v418, 0.0
      %v429 = vpack.c.bf16 %v422, %v421
      %v430 = vpack.c.bf16 %v424, %v423
      %v431 = vpack.c.bf16 %v426, %v425
      %v432 = vpack.c.bf16 %v428, %v427
      %v433 = vld [vmem:[%s3] sm:$0xf]
      %v434 = vld [vmem:[%s3 + $0x4] sm:$0xf]
      %v435 = vld [vmem:[%s3 + $0x8] sm:$0xf]
      %v436 = vld [vmem:[%s3 + $0xc] sm:$0xf]
      %v437 = vld [vmem:[%s3 + $0x10] sm:$0xf]
      %v438 = vld [vmem:[%s3 + $0x14] sm:$0xf]
      %v439 = vld [vmem:[%s3 + $0x18] sm:$0xf]
      %v440 = vld [vmem:[%s3 + $0x1c] sm:$0xf]
      %v441 = vld [vmem:[%s3 + $0x20] sm:$0xf]
      %v442 = vld [vmem:[%s3 + $0x24] sm:$0xf]
      %v443 = vld [vmem:[%s3 + $0x28] sm:$0xf]
      %v444 = vld [vmem:[%s3 + $0x2c] sm:$0xf]
      %v445 = vld [vmem:[%s3 + $0x30] sm:$0xf]
      %v446 = vld [vmem:[%s3 + $0x34] sm:$0xf]
      %v447 = vld [vmem:[%s3 + $0x38] sm:$0xf]
      %v448 = vld [vmem:[%s3 + $0x3c] sm:$0xf]
      %v449 = vld [vmem:[%s4] sm:$0x1]
      %v451 = vlaneseq
      %v452 = vshrl.u32 %v451, 7
      %v453 = vsub.s32 0, %v452
      %v454 = vrot.slane %v449, %v453
      %v472 = vunpack.c.l.b16 %v433
      %v473 = vunpack.c.l.b16 %v434
      %v474 = vunpack.c.l.b16 %v435
      %v475 = vunpack.c.l.b16 %v436
      %v476 = vunpack.c.l.b16 %v437
      %v477 = vunpack.c.l.b16 %v438
      %v478 = vunpack.c.l.b16 %v439
      %v479 = vunpack.c.l.b16 %v440
      %v480 = vunpack.c.l.b16 %v441
      %v481 = vunpack.c.l.b16 %v442
      %v482 = vunpack.c.l.b16 %v443
      %v483 = vunpack.c.l.b16 %v444
      %v484 = vunpack.c.l.b16 %v445
      %v485 = vunpack.c.l.b16 %v446
      %v486 = vunpack.c.l.b16 %v447
      %v487 = vunpack.c.l.b16 %v448
      %v488 = vpack.c.b16 %v473, %v472
      %v489 = vpack.c.b16 %v475, %v474
      %v490 = vpack.c.b16 %v477, %v476
      %v491 = vpack.c.b16 %v479, %v478
      %v492 = vpack.c.b16 %v481, %v480
      %v493 = vpack.c.b16 %v483, %v482
      %v494 = vpack.c.b16 %v485, %v484
      %v495 = vpack.c.b16 %v487, %v486
      %504 = vmatprep.subr.bf16.mxu0 0
      %505 = vmatpush1.bf16.msra.mxu0 %v488
      %506 = vmatprep.subr.bf16.mxu0 0
      %507 = vmatpush1.bf16.msra.mxu0 %v489
      %508 = vmatprep.subr.bf16.mxu0 0
      %509 = vmatpush1.bf16.msra.mxu0 %v490
      %510 = vmatprep.subr.bf16.mxu0 0
      %511 = vmatpush1.bf16.msra.mxu0 %v491
      %512 = vmatprep.subr.bf16.mxu0 0
      %513 = vmatpush1.bf16.msra.mxu0 %v492
      %514 = vmatprep.subr.bf16.mxu0 0
      %515 = vmatpush1.bf16.msra.mxu0 %v493
      %516 = vmatprep.subr.bf16.mxu0 0
      %517 = vmatpush1.bf16.msra.mxu0 %v494
      %518 = vmatprep.subr.bf16.mxu0 0
      %519 = vmatpush1.bf16.msra.mxu0 %v495
      %520 = vmatprep.subr.bf16.mxu0 0
      %521 = vmatpush1.bf16.msra.mxu0 0
      %522 = vmatprep.subr.bf16.mxu0 0
      %523 = vmatpush1.bf16.msra.mxu0 0
      %524 = vmatprep.subr.bf16.mxu0 0
      %525 = vmatpush1.bf16.msra.mxu0 0
      %526 = vmatprep.subr.bf16.mxu0 0
      %527 = vmatpush1.bf16.msra.mxu0 0
      %528 = vmatprep.subr.bf16.mxu0 0
      %529 = vmatpush1.bf16.msra.mxu0 0
      %530 = vmatprep.subr.bf16.mxu0 0
      %531 = vmatpush1.bf16.msra.mxu0 0
      %532 = vmatprep.subr.bf16.mxu0 0
      %533 = vmatpush1.bf16.msra.mxu0 0
      %534 = vmatprep.subr.bf16.mxu0 0
      %535 = vmatpush1.bf16.msra.mxu0 0
      %536 = vmatprep.mubr.bf16.mxu0 0
      %537 = vmatmul.mubr.bf16.gmra.mrb[0].mxu0 %v429
      %v538 = vpop.f32.mrb[0].mxu0
      %v539 = vadd.f32 %v454, %v538
      %v540 = vpop.f32.mrb[0].mxu0
      %v541 = vpop.f32.mrb[0].mxu0
      %v542 = vadd.f32 %v454, %v541
      %v543 = vpop.f32.mrb[0].mxu0
      %544 = vmatprep.mubr.bf16.mxu0 0
      %545 = vmatmul.mubr.bf16.gmra.mrb[0].mxu0 %v430
      %v546 = vpop.f32.mrb[0].mxu0
      %v547 = vadd.f32 %v454, %v546
      %v548 = vpop.f32.mrb[0].mxu0
      %v549 = vpop.f32.mrb[0].mxu0
      %v550 = vadd.f32 %v454, %v549
      %v551 = vpop.f32.mrb[0].mxu0
      %552 = vmatprep.mubr.bf16.mxu0 0
      %553 = vmatmul.mubr.bf16.gmra.mrb[0].mxu0 %v431
      %v554 = vpop.f32.mrb[0].mxu0
      %v555 = vadd.f32 %v454, %v554
      %v556 = vpop.f32.mrb[0].mxu0
      %v557 = vpop.f32.mrb[0].mxu0
      %v558 = vadd.f32 %v454, %v557
      %v559 = vpop.f32.mrb[0].mxu0
      %560 = vmatprep.mubr.bf16.mxu0 0
      %561 = vmatmul.mubr.bf16.gmra.mrb[0].mxu0 %v432
      %v562 = vpop.f32.mrb[0].mxu0
      %v563 = vadd.f32 %v454, %v562
      %v564 = vpop.f32.mrb[0].mxu0
      %v565 = vpop.f32.mrb[0].mxu0
      %v566 = vadd.f32 %v454, %v565
      %v567 = vpop.f32.mrb[0].mxu0
      %568 = vdwg.mxu0
      %v569 = vmax.f32 %v539, 0.0
      %v570 = vmax.f32 %v542, 0.0
      %v571 = vmax.f32 %v547, 0.0
      %v572 = vmax.f32 %v550, 0.0
      %v573 = vmax.f32 %v555, 0.0
      %v574 = vmax.f32 %v558, 0.0
      %v575 = vmax.f32 %v563, 0.0
      %v576 = vmax.f32 %v566, 0.0
      %v577 = vld [vmem:[%s5] sm:$0x1]
      %v579 = vlaneseq
      %v580 = vshrl.u32 %v579, 7
      %v581 = vsub.s32 0, %v580
      %v582 = vrot.slane %v577, %v581
      %v584 = vmul.f32 %v569, %v582
      %v585 = vmul.f32 %v570, %v582
      %v586 = vmul.f32 %v571, %v582
      %v587 = vmul.f32 %v572, %v582
      %v588 = vmul.f32 %v573, %v582
      %v589 = vmul.f32 %v574, %v582
      %v590 = vmul.f32 %v575, %v582
      %v591 = vmul.f32 %v576, %v582
      %592 = vadd.xlane.f32.xlu0 %v584
      %v593 = vpop.xlane.xlu0 %592
      %594 = vadd.xlane.f32.xlu0 %v585
      %v595 = vpop.xlane.xlu0 %594
      %596 = vadd.xlane.f32.xlu0 %v586
      %v597 = vpop.xlane.xlu0 %596
      %598 = vadd.xlane.f32.xlu0 %v587
      %v599 = vpop.xlane.xlu0 %598
      %600 = vadd.xlane.f32.xlu0 %v588
      %v601 = vpop.xlane.xlu0 %600
      %602 = vadd.xlane.f32.xlu0 %v589
      %v603 = vpop.xlane.xlu0 %602
      %604 = vadd.xlane.f32.xlu0 %v590
      %v605 = vpop.xlane.xlu0 %604
      %606 = vadd.xlane.f32.xlu0 %v591
      %v607 = vpop.xlane.xlu0 %606
      %v608 = vlaneseq
      %v609 = vand.u32 %v608, 127
      %vm610 = vcmp.lt.s32.totalorder %v609, 4
      %v619 = vlaneseq
      %v620 = vshrl.u32 %v619, 7
      %v621 = vsub.s32 %v609, %v620
      %v622 = vrot.slane %v593, %v621
      %v623 = vlaneseq
      %v624 = vshrl.u32 %v623, 7
      %v625 = vsub.s32 %v609, %v624
      %v626 = vrot.slane %v595, %v625
      %v627 = vlaneseq
      %v628 = vshrl.u32 %v627, 7
      %v629 = vsub.s32 %v609, %v628
      %v630 = vrot.slane %v597, %v629
      %v631 = vlaneseq
      %v632 = vshrl.u32 %v631, 7
      %v633 = vsub.s32 %v609, %v632
      %v634 = vrot.slane %v599, %v633
      %v635 = vlaneseq
      %v636 = vshrl.u32 %v635, 7
      %v637 = vsub.s32 %v609, %v636
      %v638 = vrot.slane %v601, %v637
      %v639 = vlaneseq
      %v640 = vshrl.u32 %v639, 7
      %v641 = vsub.s32 %v609, %v640
      %v642 = vrot.slane %v603, %v641
      %v643 = vlaneseq
      %v644 = vshrl.u32 %v643, 7
      %v645 = vsub.s32 %v609, %v644
      %v646 = vrot.slane %v605, %v645
      %v647 = vlaneseq
      %v648 = vshrl.u32 %v647, 7
      %v649 = vsub.s32 %v609, %v648
      %v650 = vrot.slane %v607, %v649
      %vm651 = vcmask 1041409
      %v652 = vsel %vm651, %v626, %v622
      %vm653 = vcmask 1042434
      %v654 = vsel %vm653, %v630, %v652
      %vm655 = vcmask 1043459
      %v656 = vsel %vm655, %v634, %v654
      %vm657 = vcmask 1044484
      %v658 = vsel %vm657, %v638, %v656
      %vm659 = vcmask 1045509
      %v660 = vsel %vm659, %v642, %v658
      %vm661 = vcmask 1046534
      %v662 = vsel %vm661, %v646, %v660
      %vm663 = vcmask 1047559
      %v664 = vsel %vm663, %v650, %v662
      %v666 = vsel %vm610, %v664, -1e+30
      %vm667 = vcmask 64512
      %v668 = vsel %vm667, %v666, -inf
      %669 = vmax.xlane.f32.xlu0 %v668
      %v670 = vpop.xlane.xlu0 %669
      %v671 = vsub.f32 %v666, %v670
      %v672 = vmul.f32 %v671, 1.442695
      %v673 = vpow.pop %v672
      %v674 = vsel %vm667, %v673, 0.0
      %675 = vadd.xlane.f32.xlu0 %v674
      %v676 = vpop.xlane.xlu0 %675
      %v677 = vrcp.pop %v676
      %v678 = vmul.f32 %v673, %v677
      %v679 = vlaneseq
      %v680 = vshrl.u32 %v679, 7
      %v681 = vsub.s32 0, %v680
      %v682 = vrot.slane %v678, %v681
      %684 = vbcast.lane.b32.xlu0 %v682, 256
      %v685 = vpop.permute.xlu0 %684
      %v686 = vlaneseq
      %v687 = vshrl.u32 %v686, 7
      %v688 = vsub.s32 1, %v687
      %v689 = vrot.slane %v678, %v688
      %691 = vbcast.lane.b32.xlu0 %v689, 256
      %v692 = vpop.permute.xlu0 %691
      %v693 = vlaneseq
      %v694 = vshrl.u32 %v693, 7
      %v695 = vsub.s32 2, %v694
      %v696 = vrot.slane %v678, %v695
      %698 = vbcast.lane.b32.xlu0 %v696, 256
      %v699 = vpop.permute.xlu0 %698
      %v700 = vlaneseq
      %v701 = vshrl.u32 %v700, 7
      %v702 = vsub.s32 3, %v701
      %v703 = vrot.slane %v678, %v702
      %705 = vbcast.lane.b32.xlu0 %v703, 256
      %v706 = vpop.permute.xlu0 %705
      %v707 = vlaneseq
      %v708 = vshrl.u32 %v707, 7
      %v709 = vsub.s32 4, %v708
      %v710 = vrot.slane %v678, %v709
      %712 = vbcast.lane.b32.xlu0 %v710, 256
      %v713 = vpop.permute.xlu0 %712
      %v714 = vlaneseq
      %v715 = vshrl.u32 %v714, 7
      %v716 = vsub.s32 5, %v715
      %v717 = vrot.slane %v678, %v716
      %719 = vbcast.lane.b32.xlu0 %v717, 256
      %v720 = vpop.permute.xlu0 %719
      %v721 = vlaneseq
      %v722 = vshrl.u32 %v721, 7
      %v723 = vsub.s32 6, %v722
      %v724 = vrot.slane %v678, %v723
      %726 = vbcast.lane.b32.xlu0 %v724, 256
      %v727 = vpop.permute.xlu0 %726
      %v728 = vlaneseq
      %v729 = vshrl.u32 %v728, 7
      %v730 = vsub.s32 7, %v729
      %v731 = vrot.slane %v678, %v730
      %733 = vbcast.lane.b32.xlu0 %v731, 256
      %v734 = vpop.permute.xlu0 %733
      %v735 = vmul.f32 %v569, %v685
      %v736 = vmul.f32 %v570, %v692
      %v737 = vmul.f32 %v571, %v699
      %v738 = vmul.f32 %v572, %v706
      %v739 = vmul.f32 %v573, %v713
      %v740 = vmul.f32 %v574, %v720
      %v741 = vmul.f32 %v575, %v727
      %v742 = vmul.f32 %v576, %v734
      %v743 = vrot.slane %v735, 4
      %v744 = vadd.f32 %v735, %v743
      %v745 = vrot.slane %v744, 2
      %v746 = vadd.f32 %v744, %v745
      %v747 = vrot.slane %v746, 1
      %v748 = vadd.f32 %v746, %v747
      %v749 = vrot.slane %v736, 4
      %v750 = vadd.f32 %v736, %v749
      %v751 = vrot.slane %v750, 2
      %v752 = vadd.f32 %v750, %v751
      %v753 = vrot.slane %v752, 1
      %v754 = vadd.f32 %v752, %v753
      %v755 = vrot.slane %v737, 4
      %v756 = vadd.f32 %v737, %v755
      %v757 = vrot.slane %v756, 2
      %v758 = vadd.f32 %v756, %v757
      %v759 = vrot.slane %v758, 1
      %v760 = vadd.f32 %v758, %v759
      %v761 = vrot.slane %v738, 4
      %v762 = vadd.f32 %v738, %v761
      %v763 = vrot.slane %v762, 2
      %v764 = vadd.f32 %v762, %v763
      %v765 = vrot.slane %v764, 1
      %v766 = vadd.f32 %v764, %v765
      %v767 = vrot.slane %v739, 4
      %v768 = vadd.f32 %v739, %v767
      %v769 = vrot.slane %v768, 2
      %v770 = vadd.f32 %v768, %v769
      %v771 = vrot.slane %v770, 1
      %v772 = vadd.f32 %v770, %v771
      %v773 = vrot.slane %v740, 4
      %v774 = vadd.f32 %v740, %v773
      %v775 = vrot.slane %v774, 2
      %v776 = vadd.f32 %v774, %v775
      %v777 = vrot.slane %v776, 1
      %v778 = vadd.f32 %v776, %v777
      %v779 = vrot.slane %v741, 4
      %v780 = vadd.f32 %v741, %v779
      %v781 = vrot.slane %v780, 2
      %v782 = vadd.f32 %v780, %v781
      %v783 = vrot.slane %v782, 1
      %v784 = vadd.f32 %v782, %v783
      %v785 = vrot.slane %v742, 4
      %v786 = vadd.f32 %v742, %v785
      %v787 = vrot.slane %v786, 2
      %v788 = vadd.f32 %v786, %v787
      %v789 = vrot.slane %v788, 1
      %v790 = vadd.f32 %v788, %v789
      %v799 = vsel %vm651, %v754, %v748
      %v800 = vsel %vm653, %v760, %v799
      %v801 = vsel %vm655, %v766, %v800
      %v802 = vsel %vm657, %v772, %v801
      %v803 = vsel %vm659, %v778, %v802
      %v804 = vsel %vm661, %v784, %v803
      %v805 = vsel %vm663, %v790, %v804
      %807 = vst [vmem:[%s251] sm:$0xff] %v805
      %p808 = scmp.lt.s32.totalorder %s17, 1
      %s809 = scalar_select %p808, %s17, 1
      %s810 = smul.addr %s809, 8
      %s811 = scalar_lea.vmem %s6, %s810
      // Predicated region
      $region45: #{transition_down_atten.1} parent=43 // pred_check
        %p812 = pneg %p166
      $region46: #{transition_down_atten.1} parent=43 // pred_check_branch
        %814 = sbr.rel (%p812) target = $region48
      $region47: #{transition_down_atten.1} parent=43 // pred_region
        _
      $region48: #{transition_down_atten.1} parent=43 // pred_fallthru
        _
    $region44: #{transition_down_atten.1} parent=5 // pred_fallthru
      _
    %p815 = scmp.le.s32.totalorder 2, %s12
    // Predicated region
    $region49: #{transition_down_atten.1} parent=5 // pred_check
      %p816 = pneg %p815
    $region50: #{transition_down_atten.1} parent=5 // pred_check_branch
      %818 = sbr.rel (%p816) target = $region52
    $region51: #{transition_down_atten.1} parent=5 // pred_region
      %s819 = ssub.s32 %s12, 2
      // Predicated region
      $region53: #{transition_down_atten.1} parent=51 // pred_check
        %p820 = pneg %p172
      $region54: #{transition_down_atten.1} parent=51 // pred_check_branch
        %822 = sbr.rel (%p820) target = $region56
      $region55: #{transition_down_atten.1} parent=51 // pred_region
        %p823 = scmp.lt.s32.totalorder %s18, 1
        %s824 = scalar_select %p823, %s18, 1
        %s825 = smul.addr %s824, 8
        %s826 = scalar_lea.vmem %s6, %s825
      $region56: #{transition_down_atten.1} parent=51 // pred_fallthru
        _
    $region52: #{transition_down_atten.1} parent=5 // pred_fallthru
      _
  $region6: #{transition_down_atten.1} parent=0 // loop_footer
    %s16 = sadd.s32 1, %s12
  $region7: #{transition_down_atten.1} parent=0 // loop_footer_branch
    %11 = sbr.rel target = $region3
  $region8: #{transition_down_atten.1} parent=0 // loop_exit
    _

</llo_original>
